<compile_context>
chip_gen: v7x
topology: tpu7x:2x2x1
jax: 0.10.0
libtpu: 0.0.40
codegen_flags: <defaults>
</compile_context>

<pallas_src>
import jax
import jax.numpy as jnp
from jax.experimental import pallas as pl
from jax.experimental.pallas import tpu as pltpu
import numpy as np


def _round_up(x, m):
    return (x + m - 1) // m * m


def _tile_batch(n, tm_max=256):
    """Pick the batch tile: big (HBM-roofline friendly) but >= 2 tiles when possible
    so the 'parallel' grid axis can shard across TensorCores (v7x megacore)."""
    if n <= 8:
        tm = _round_up(max(n, 1), 8)
    else:
        tm = min(tm_max, _round_up((n + 1) // 2, 8))
    n_pad = _round_up(n, tm)
    return tm, n_pad


def _make_train_kernel(inv_temp, k_actual):
    """Fused student linear + distillation (temperature softmax target, masked SSE)."""

    def kernel(x_ref, w_ref, b_ref, t_ref, mask_ref, logits_ref, loss_ref):
        # ---- student: flatten(image) @ W + b  (bf16 operands on the MXU, f32 accumulate)
        x_bf = x_ref[...].astype(jnp.bfloat16)          # f32 -> bf16 cast on the VPU
        logits = jnp.dot(x_bf, w_ref[...], preferred_element_type=jnp.float32)
        logits = logits + b_ref[...]
        logits_ref[...] = logits                        # lane-dense store (kp % 128 == 0)

        # ---- distillation target: softmax(target / T, dim=1) over the real K classes
        t = t_ref[...] * inv_temp
        t = t - jnp.max(t, axis=1, keepdims=True)
        e = jnp.exp(t)
        p = e / jnp.sum(e, axis=1, keepdims=True)

        # ---- partial sum of squared errors for this batch tile.
        # Padded logit columns never enter (we slice the first K lanes); padded batch
        # rows are zeroed by the row-validity mask.  Global mean is done in the wrapper.
        diff = (logits[:, :k_actual] - p) * mask_ref[...]
        loss_ref[0, 0] = jnp.sum(diff * diff)

    return kernel


def _student_kernel(x_ref, w_ref, b_ref, logits_ref):
    """Eval-path kernel: student matmul only (no target / loss work)."""
    x_bf = x_ref[...].astype(jnp.bfloat16)
    logits_ref[...] = (
        jnp.dot(x_bf, w_ref[...], preferred_element_type=jnp.float32) + b_ref[...]
    )


def _pad_params(w, b, kp):
    D, K = w.shape
    w_in = jnp.zeros((D, kp), jnp.bfloat16).at[:, :K].set(w.astype(jnp.bfloat16))
    b_in = jnp.zeros((1, kp), jnp.float32).at[:, :K].set(b.astype(jnp.float32))
    return w_in, b_in


def distiller_forward_train(image, target, w, b, softmax_temp):
    """Distiller.forward_train: (logits_student, {'mse': loss})."""
    N = image.shape[0]
    D, K = w.shape
    kp = _round_up(K, 128)                       # lane-dense logits width

    x = image.reshape(N, -1).astype(jnp.float32)  # torch .view(N, -1)
    assert x.shape[1] == D

    tm, n_pad = _tile_batch(N)
    n_bt = n_pad // tm

    # x stays f32 (cast to bf16 per tile inside the kernel); pad rows only if needed.
    if n_pad != N:
        x_in = jnp.zeros((n_pad, D), jnp.float32).at[:N].set(x)
        t_in = jnp.zeros((n_pad, K), jnp.float32).at[:N].set(target.astype(jnp.float32))
    else:
        x_in = x
        t_in = target.astype(jnp.float32)
    # per-row validity (1.0 real / 0.0 padded) -> no program_id / iota needed in-kernel.
    row_mask = (jnp.arange(n_pad, dtype=jnp.int32) < N).astype(jnp.float32)[:, None]

    # weights: bf16 for the MXU; zero-padded classes make padded logit columns exactly 0.
    w_in, b_in = _pad_params(w, b, kp)

    kernel = _make_train_kernel(float(1.0 / softmax_temp), K)

    cost = pl.CostEstimate(
        flops=2 * n_pad * D * kp,
        transcendentals=n_pad * K,
        bytes_accessed=(4 * n_pad * D          # x (f32, streamed once)
                        + 2 * D * kp           # W (bf16, resident - read once)
                        + 4 * kp               # bias
                        + 4 * n_pad * K        # target
                        + 4 * n_pad            # row mask
                        + 4 * n_pad * kp       # logits out
                        + 4 * n_bt),           # per-tile SSE
    )

    logits_p, loss_parts = pl.pallas_call(
        kernel,
        out_shape=(
            jax.ShapeDtypeStruct((n_pad, kp), jnp.float32),   # lane-dense logits
            jax.ShapeDtypeStruct((n_bt, 1), jnp.float32),     # per-batch-tile SSE
        ),
        grid=(n_bt,),
        in_specs=[
            pl.BlockSpec((tm, D), lambda i: (i, 0)),    # x tile (f32)
            pl.BlockSpec((D, kp), lambda i: (0, 0)),    # W resident (fetched once)
            pl.BlockSpec((1, kp), lambda i: (0, 0)),    # bias resident
            pl.BlockSpec((tm, K), lambda i: (i, 0)),    # target tile (real K lanes)
            pl.BlockSpec((tm, 1), lambda i: (i, 0)),    # row-validity mask
        ],
        out_specs=(
            pl.BlockSpec((tm, kp), lambda i: (i, 0)),
            pl.BlockSpec((1, 1), lambda i: (i, 0),
                         memory_space=pltpu.MemorySpace.SMEM),
        ),
        compiler_params=pltpu.CompilerParams(
            dimension_semantics=("parallel",),
            vmem_limit_bytes=32 * 1024 * 1024,
        ),
        cost_estimate=cost,
    )(x_in, w_in, b_in, t_in, row_mask)

    logits = logits_p[:N, :K]
    loss = jnp.sum(loss_parts) / float(N * K)    # mean over the REAL N*K elements
    return logits, {"mse": loss}


def distiller_forward_test(image, w, b):
    """Distiller.forward_test: student(image) only (matmul kernel, no loss work)."""
    N = image.shape[0]
    D, K = w.shape
    kp = _round_up(K, 128)
    x = image.reshape(N, -1).astype(jnp.float32)
    tm, n_pad = _tile_batch(N)
    n_bt = n_pad // tm
    x_in = x if n_pad == N else jnp.zeros((n_pad, D), jnp.float32).at[:N].set(x)
    w_in, b_in = _pad_params(w, b, kp)

    logits_p = pl.pallas_call(
        _student_kernel,
        out_shape=jax.ShapeDtypeStruct((n_pad, kp), jnp.float32),
        grid=(n_bt,),
        in_specs=[
            pl.BlockSpec((tm, D), lambda i: (i, 0)),
            pl.BlockSpec((D, kp), lambda i: (0, 0)),
            pl.BlockSpec((1, kp), lambda i: (0, 0)),
        ],
        out_specs=pl.BlockSpec((tm, kp), lambda i: (i, 0)),
        compiler_params=pltpu.CompilerParams(
            dimension_semantics=("parallel",),
            vmem_limit_bytes=32 * 1024 * 1024,
        ),
    )(x_in, w_in, b_in)
    return logits_p[:N, :K]


def distiller_forward(image, target, w, b, softmax_temp, training=True):
    """Distiller.forward: training -> forward_train, eval -> forward_test."""
    if training:
        return distiller_forward_train(image, target, w, b, softmax_temp)
    return distiller_forward_test(image, w, b)


if __name__ == "__main__":
    # Small deterministic shapes consistent with the module's forward_train.
    N, C, H, W_sp = 2, 4, 16, 16
    D = C * H * W_sp          # 1024 flattened features
    K = 32                    # number of classes (student logits / target dim=1)
    SOFTMAX_TEMP = 4.0        # cfg.SOLVER.SOFTMAX_TEMP

    key = jax.random.PRNGKey(0)
    k_img, k_tgt, k_w, k_b = jax.random.split(key, 4)

    image = jax.random.normal(k_img, (N, C, H, W_sp), dtype=jnp.float32)
    target = jax.random.normal(k_tgt, (N, K), dtype=jnp.float32)   # soft targets
    w = jax.random.normal(k_w, (D, K), dtype=jnp.float32) * 0.02
    b = jax.random.normal(k_b, (1, K), dtype=jnp.float32) * 0.01

    logits, losses = distiller_forward(image, target, w, b, SOFTMAX_TEMP, training=True)
    logits = jax.block_until_ready(logits)
    mse = jax.block_until_ready(losses["mse"])

    # Pure-JAX reference with the same bf16 operand rounding the kernel uses on the MXU.
    xb = image.reshape(N, D).astype(jnp.bfloat16).astype(jnp.float32)
    wb = w.astype(jnp.bfloat16).astype(jnp.float32)
    ref_logits = xb @ wb + b
    ref_soft = jax.nn.softmax(target / SOFTMAX_TEMP, axis=1)
    ref_mse = jnp.mean((ref_logits - ref_soft) ** 2)

    np.testing.assert_allclose(np.asarray(logits), np.asarray(ref_logits),
                               rtol=1e-3, atol=1e-3)
    np.testing.assert_allclose(np.asarray(mse), np.asarray(ref_mse),
                               rtol=5e-3, atol=1e-5)

    print("KERNEL_OK")
</pallas_src>

<mosaic_0001>
module attributes {stable_mosaic.version = 11 : i64} {
  func.func @kernel(%arg0: i32, %arg1: memref<8x1024xf32, #tpu.memory_space<vmem>>, %arg2: memref<1024x128xbf16, #tpu.memory_space<vmem>>, %arg3: memref<1x128xf32, #tpu.memory_space<vmem>>, %arg4: memref<8x32xf32, #tpu.memory_space<vmem>>, %arg5: memref<8x1xf32, #tpu.memory_space<vmem>>, %arg6: memref<8x128xf32, #tpu.memory_space<vmem>>, %arg7: memref<1x1xf32, #tpu.memory_space<smem>>) attributes {dimension_semantics = [#tpu.dimension_semantics<parallel>], iteration_bounds = array<i64: 1>, scalar_prefetch = 0 : i64, scratch_operands = 0 : i64, tpu.core_type = #tpu.core_type<tc>, window_params = [{transform_indices = @transform_0, window_bounds = array<i64: 8, 1024>}, {pipeline_mode = #tpu.pipeline_mode<synchronous>, transform_indices = @transform_1, window_bounds = array<i64: 1024, 128>}, {pipeline_mode = #tpu.pipeline_mode<synchronous>, transform_indices = @transform_2, window_bounds = array<i64: 1, 128>}, {transform_indices = @transform_3, window_bounds = array<i64: 8, 32>}, {transform_indices = @transform_4, window_bounds = array<i64: 8, 1>}, {transform_indices = @transform_5, window_bounds = array<i64: 8, 128>}, {transform_indices = @transform_6, window_bounds = array<i64: 1, 1>}]} {
    %c0 = arith.constant 0 : index
    %c0_0 = arith.constant 0 : index
    %0 = vector.load %arg1[%c0, %c0_0] : memref<8x1024xf32, #tpu.memory_space<vmem>>, vector<8x1024xf32>
    %1 = arith.truncf %0 : vector<8x1024xf32> to vector<8x1024xbf16>
    %c0_1 = arith.constant 0 : index
    %c0_2 = arith.constant 0 : index
    %2 = vector.load %arg2[%c0_1, %c0_2] : memref<1024x128xbf16, #tpu.memory_space<vmem>>, vector<1024x128xbf16>
    %cst = arith.constant dense<0.000000e+00> : vector<8x128xf32>
    %3 = tpu.matmul %1, %2, %cst {dimension_numbers = #tpu.dot_dimension_numbers<[1], [0], [0], [1], [0, 0, 1, 1], [], []>} : vector<8x1024xbf16>, vector<1024x128xbf16>, vector<8x128xf32> -> vector<8x128xf32>
    %c0_3 = arith.constant 0 : index
    %c0_4 = arith.constant 0 : index
    %4 = vector.load %arg3[%c0_3, %c0_4] : memref<1x128xf32, #tpu.memory_space<vmem>>, vector<1x128xf32>
    %5 = vector.broadcast %4 : vector<1x128xf32> to vector<8x128xf32>
    %6 = arith.addf %3, %5 : vector<8x128xf32>
    %c0_5 = arith.constant 0 : index
    %c0_6 = arith.constant 0 : index
    %7 = vector.load %arg6[%c0_5, %c0_6] : memref<8x128xf32, #tpu.memory_space<vmem>>, vector<8x128xf32>
    tpu.vector_store %arg6[%c0_5, %c0_6], %6 {strides = array<i32>} : memref<8x128xf32, #tpu.memory_space<vmem>>, vector<8x128xf32>,
    %c0_7 = arith.constant 0 : index
    %c0_8 = arith.constant 0 : index
    %8 = vector.load %arg4[%c0_7, %c0_8] : memref<8x32xf32, #tpu.memory_space<vmem>>, vector<8x32xf32>
    %cst_9 = arith.constant 2.500000e-01 : f32
    %9 = vector.broadcast %cst_9 : f32 to vector<8x32xf32>
    %10 = arith.mulf %8, %9 : vector<8x32xf32>
    %cst_10 = arith.constant dense<0xFF800000> : vector<8xf32>
    %11 = vector.multi_reduction <maximumf>, %10, %cst_10 [1] : vector<8x32xf32> to vector<8xf32>
    %12 = vector.shape_cast %11 : vector<8xf32> to vector<8x1xf32>
    %13 = vector.broadcast %12 : vector<8x1xf32> to vector<8x32xf32>
    %14 = arith.subf %10, %13 : vector<8x32xf32>
    %15 = math.exp %14 : vector<8x32xf32>
    %cst_11 = arith.constant dense<0.000000e+00> : vector<8xf32>
    %16 = vector.multi_reduction <add>, %15, %cst_11 [1] : vector<8x32xf32> to vector<8xf32>
    %17 = vector.shape_cast %16 : vector<8xf32> to vector<8x1xf32>
    %18 = vector.broadcast %17 : vector<8x1xf32> to vector<8x32xf32>
    %19 = arith.divf %15, %18 : vector<8x32xf32>
    %20 = vector.extract_strided_slice %6 {offsets = [0, 0], sizes = [8, 32], strides = [1, 1]} : vector<8x128xf32> to vector<8x32xf32>
    %21 = arith.subf %20, %19 : vector<8x32xf32>
    %c0_12 = arith.constant 0 : index
    %c0_13 = arith.constant 0 : index
    %22 = vector.load %arg5[%c0_12, %c0_13] : memref<8x1xf32, #tpu.memory_space<vmem>>, vector<8x1xf32>
    %23 = vector.broadcast %22 : vector<8x1xf32> to vector<8x32xf32>
    %24 = arith.mulf %21, %23 : vector<8x32xf32>
    %25 = arith.mulf %24, %24 : vector<8x32xf32>
    %26 = vector.shape_cast %25 : vector<8x32xf32> to vector<1x8x32xf32>
    %cst_14 = arith.constant dense<0.000000e+00> : vector<1xf32>
    %27 = vector.multi_reduction <add>, %26, %cst_14 [1, 2] : vector<1x8x32xf32> to vector<1xf32>
    %28 = vector.shape_cast %27 : vector<1xf32> to vector<1x1x1xf32>
    %29 = vector.extract %28[0, 0, 0] : f32 from vector<1x1x1xf32>
    %c0_15 = arith.constant 0 : index
    %c0_16 = arith.constant 0 : index
    %30 = memref.load %arg7[%c0_15, %c0_16] : memref<1x1xf32, #tpu.memory_space<smem>>
    memref.store %29, %arg7[%c0_15, %c0_16] : memref<1x1xf32, #tpu.memory_space<smem>>
    return
  }
  func.func @transform_0(%arg0: i32) -> (i32, i32) {
    %c0_i32 = arith.constant 0 : i32
    %c0_i32_0 = arith.constant 0 : i32
    return %arg0, %c0_i32 : i32, i32
  }
  func.func @transform_1(%arg0: i32) -> (i32, i32) {
    %c0_i32 = arith.constant 0 : i32
    %c0_i32_0 = arith.constant 0 : i32
    %c0_i32_1 = arith.constant 0 : i32
    return %c0_i32, %c0_i32_0 : i32, i32
  }
  func.func @transform_2(%arg0: i32) -> (i32, i32) {
    %c0_i32 = arith.constant 0 : i32
    %c0_i32_0 = arith.constant 0 : i32
    %c0_i32_1 = arith.constant 0 : i32
    return %c0_i32, %c0_i32_0 : i32, i32
  }
  func.func @transform_3(%arg0: i32) -> (i32, i32) {
    %c0_i32 = arith.constant 0 : i32
    %c0_i32_0 = arith.constant 0 : i32
    return %arg0, %c0_i32 : i32, i32
  }
  func.func @transform_4(%arg0: i32) -> (i32, i32) {
    %c0_i32 = arith.constant 0 : i32
    %c0_i32_0 = arith.constant 0 : i32
    return %arg0, %c0_i32 : i32, i32
  }
  func.func @transform_5(%arg0: i32) -> (i32, i32) {
    %c0_i32 = arith.constant 0 : i32
    %c0_i32_0 = arith.constant 0 : i32
    return %arg0, %c0_i32 : i32, i32
  }
  func.func @transform_6(%arg0: i32) -> (i32, i32) {
    %c0_i32 = arith.constant 0 : i32
    %c0_i32_0 = arith.constant 0 : i32
    return %arg0, %c0_i32 : i32, i32
  }
}

</mosaic_0001>

<llo_original>
// kernel: tpu_custom_call.1
$region0: #{tpu_custom_call.1}
  #allocation0 [shape = 'u32[]', space=smem, size = 0x4, offset = 0x4, fixed_abs, tag = 'smem constant byte address 0x4 - core index']
  #allocation1 [shape = 'u32[144,128]{1,0:T(1,128)}', space=vmem, size = 0x12000, scoped, tag = 'internal scratch']
  %s0 = inlined_call_operand.hbm [shape: f32[8,1024], index: 0, kind: input, shape index: {}]
  %s1 = inlined_call_operand.hbm [shape: bf16[1024,128], index: 1, kind: input, shape index: {}]
  %s2 = inlined_call_operand.vmem [shape: f32[1,128], index: 2, kind: input, shape index: {}]
  %s3 = inlined_call_operand.vmem [shape: f32[8,32], index: 3, kind: input, shape index: {}]
  %s4 = inlined_call_operand.vmem [shape: f32[8,1], index: 4, kind: input, shape index: {}]
  %s5 = inlined_call_operand.hbm [shape: f32[8,128], index: 5, kind: output, shape index: {0}]
  %s6 = inlined_call_operand.hbm [shape: f32[1,1], index: 6, kind: output, shape index: {1}]
  %7 = xla_tuple %s5, %s6
  %s8 = sld [smem:[#allocation0]]
  $region46: #{tpu_custom_call.1} parent=0
    _
  %s10 = ssub.s32 1, %s8
  %s11 = scalar_select 0, %s10, %s8
  $region1: #{tpu_custom_call.1} parent=0
    #allocation2 [shape = 'u8[32768]{0}', space=vmem, size = 0x8000, scoped, tag = 'input window, operand 0, single buffered']
    #allocation3 [shape = 's32[1]{0}', space=sflag, size = 0x4, scoped, tag = 'scoped memory for tpu_custom_call.1']
    #allocation4 [shape = 's32[1]{0}', space=sflag, size = 0x4, scoped, tag = 'scoped memory for tpu_custom_call.1']
    #allocation5 [shape = 's32[1]{0}', space=sflag, size = 0x4, scoped, tag = 'scoped memory for tpu_custom_call.1']
    #allocation6 [shape = 'u8[262144]{0}', space=vmem, size = 0x40000, scoped, tag = 'input window, operand 1, single buffered']
    #allocation7 [shape = 's32[1]{0}', space=sflag, size = 0x4, scoped, tag = 'scoped memory for tpu_custom_call.1']
    #allocation8 [shape = 'u8[4096]{0}', space=vmem, size = 0x1000, scoped, tag = 'output window, operand 0, single buffered']
    #allocation9 [shape = 'u8[512]{0}', space=smem, size = 0x200, scoped, tag = 'output window, operand 1, single buffered']
    %12 = vsyncpa [#allocation3], 0
    %13 = vsyncpa [#allocation7], 0
    %14 = vsyncpa [#allocation4], 0
    %15 = vsyncpa [#allocation5], 0
    // Predicated region
    $region2: #{tpu_custom_call.1} parent=1 // pred_check
      _
    $region3: #{tpu_custom_call.1} parent=1 // pred_check_branch
      %17 = sbr.rel (0) target = $region5
    $region4: #{tpu_custom_call.1} parent=1 // pred_region
      %s19 = ssub.s32 1024, 1024
      %20 = vsyncadd [#allocation3], %s19
      %s22 = sshll.u32 [#allocation2], 4
      %s23 = int_to_ptr.vmem [resolvable:$true] %s22
      %25 = dma.hbm_to_vmem [thread:$0]  %s0, 1024, %s23, [#allocation3]
    $region5: #{tpu_custom_call.1} parent=1 // pred_fallthru
      _
    // Predicated region
    $region6: #{tpu_custom_call.1} parent=1 // pred_check
      _
    $region7: #{tpu_custom_call.1} parent=1 // pred_check_branch
      %27 = sbr.rel (0) target = $region9
    $region8: #{tpu_custom_call.1} parent=1 // pred_region
      %s29 = ssub.s32 8192, 8192
      %30 = vsyncadd [#allocation7], %s29
      %s31 = sshll.u32 [#allocation6], 4
      %s32 = int_to_ptr.vmem [resolvable:$true] %s31
      %37 = dma.hbm_to_vmem [thread:$0]  %s1, 8192, %s32, [#allocation7], 64, 64, 4
    $region9: #{tpu_custom_call.1} parent=1 // pred_fallthru
      _
    // Predicated region
    $region10: #{tpu_custom_call.1} parent=1 // pred_check
      _
    $region11: #{tpu_custom_call.1} parent=1 // pred_check_branch
      %39 = sbr.rel (0) target = $region13
    $region12: #{tpu_custom_call.1} parent=1 // pred_region
      _
    $region13: #{tpu_custom_call.1} parent=1 // pred_fallthru
      _
    // Predicated region
    $region14: #{tpu_custom_call.1} parent=1 // pred_check
      _
    $region15: #{tpu_custom_call.1} parent=1 // pred_check_branch
      %41 = sbr.rel (0) target = $region17
    $region16: #{tpu_custom_call.1} parent=1 // pred_region
      _
    $region17: #{tpu_custom_call.1} parent=1 // pred_fallthru
      _
    // Predicated region
    $region18: #{tpu_custom_call.1} parent=1 // pred_check
      _
    $region19: #{tpu_custom_call.1} parent=1 // pred_check_branch
      %43 = sbr.rel (0) target = $region21
    $region20: #{tpu_custom_call.1} parent=1 // pred_region
      _
    $region21: #{tpu_custom_call.1} parent=1 // pred_fallthru
      _
    // Predicated region
    $region22: #{tpu_custom_call.1} parent=1 // pred_check
      _
    $region23: #{tpu_custom_call.1} parent=1 // pred_check_branch
      %45 = sbr.rel (0) target = $region25
    $region24: #{tpu_custom_call.1} parent=1 // pred_region
      %46 = dma.done [#allocation3], 1024
    $region25: #{tpu_custom_call.1} parent=1 // pred_fallthru
      _
    // Predicated region
    $region26: #{tpu_custom_call.1} parent=1 // pred_check
      _
    $region27: #{tpu_custom_call.1} parent=1 // pred_check_branch
      %48 = sbr.rel (0) target = $region29
    $region28: #{tpu_custom_call.1} parent=1 // pred_region
      %49 = dma.done [#allocation7], 8192
    $region29: #{tpu_custom_call.1} parent=1 // pred_fallthru
      _
    %v51 = vld [vmem:[#allocation2] sm:$0xff]
    %v52 = vld [vmem:[#allocation2 + $0x8] sm:$0xff]
    %v53 = vld [vmem:[#allocation2 + $0x10] sm:$0xff]
    %v54 = vld [vmem:[#allocation2 + $0x18] sm:$0xff]
    %v55 = vld [vmem:[#allocation2 + $0x20] sm:$0xff]
    %v56 = vld [vmem:[#allocation2 + $0x28] sm:$0xff]
    %v57 = vld [vmem:[#allocation2 + $0x30] sm:$0xff]
    %v58 = vld [vmem:[#allocation2 + $0x38] sm:$0xff]
    %v59 = vpack.c.bf16 %v51, %v51
    %v60 = vpack.c.bf16 %v52, %v52
    %v61 = vpack.c.bf16 %v53, %v53
    %v62 = vpack.c.bf16 %v54, %v54
    %v63 = vpack.c.bf16 %v55, %v55
    %v64 = vpack.c.bf16 %v56, %v56
    %v65 = vpack.c.bf16 %v57, %v57
    %v66 = vpack.c.bf16 %v58, %v58
    %v67 = vld [vmem:[#allocation6] sm:$0xf]
    %v68 = vld [vmem:[#allocation6 + $0x4] sm:$0xf]
    %v69 = vld [vmem:[#allocation6 + $0x8] sm:$0xf]
    %v70 = vld [vmem:[#allocation6 + $0xc] sm:$0xf]
    %v71 = vld [vmem:[#allocation6 + $0x10] sm:$0xf]
    %v72 = vld [vmem:[#allocation6 + $0x14] sm:$0xf]
    %v73 = vld [vmem:[#allocation6 + $0x18] sm:$0xf]
    %v74 = vld [vmem:[#allocation6 + $0x1c] sm:$0xf]
    %v75 = vld [vmem:[#allocation6 + $0x20] sm:$0xf]
    %v76 = vld [vmem:[#allocation6 + $0x24] sm:$0xf]
    %v77 = vld [vmem:[#allocation6 + $0x28] sm:$0xf]
    %v78 = vld [vmem:[#allocation6 + $0x2c] sm:$0xf]
    %v79 = vld [vmem:[#allocation6 + $0x30] sm:$0xf]
    %v80 = vld [vmem:[#allocation6 + $0x34] sm:$0xf]
    %v81 = vld [vmem:[#allocation6 + $0x38] sm:$0xf]
    %v82 = vld [vmem:[#allocation6 + $0x3c] sm:$0xf]
    %v83 = vld [vmem:[#allocation6 + $0x40] sm:$0xf]
    %v84 = vld [vmem:[#allocation6 + $0x44] sm:$0xf]
    %v85 = vld [vmem:[#allocation6 + $0x48] sm:$0xf]
    %v86 = vld [vmem:[#allocation6 + $0x4c] sm:$0xf]
    %v87 = vld [vmem:[#allocation6 + $0x50] sm:$0xf]
    %v88 = vld [vmem:[#allocation6 + $0x54] sm:$0xf]
    %v89 = vld [vmem:[#allocation6 + $0x58] sm:$0xf]
    %v90 = vld [vmem:[#allocation6 + $0x5c] sm:$0xf]
    %v91 = vld [vmem:[#allocation6 + $0x60] sm:$0xf]
    %v92 = vld [vmem:[#allocation6 + $0x64] sm:$0xf]
    %v93 = vld [vmem:[#allocation6 + $0x68] sm:$0xf]
    %v94 = vld [vmem:[#allocation6 + $0x6c] sm:$0xf]
    %v95 = vld [vmem:[#allocation6 + $0x70] sm:$0xf]
    %v96 = vld [vmem:[#allocation6 + $0x74] sm:$0xf]
    %v97 = vld [vmem:[#allocation6 + $0x78] sm:$0xf]
    %v98 = vld [vmem:[#allocation6 + $0x7c] sm:$0xf]
    %v99 = vld [vmem:[#allocation6 + $0x80] sm:$0xf]
    %v100 = vld [vmem:[#allocation6 + $0x84] sm:$0xf]
    %v101 = vld [vmem:[#allocation6 + $0x88] sm:$0xf]
    %v102 = vld [vmem:[#allocation6 + $0x8c] sm:$0xf]
    %v103 = vld [vmem:[#allocation6 + $0x90] sm:$0xf]
    %v104 = vld [vmem:[#allocation6 + $0x94] sm:$0xf]
    %v105 = vld [vmem:[#allocation6 + $0x98] sm:$0xf]
    %v106 = vld [vmem:[#allocation6 + $0x9c] sm:$0xf]
    %v107 = vld [vmem:[#allocation6 + $0xa0] sm:$0xf]
    %v108 = vld [vmem:[#allocation6 + $0xa4] sm:$0xf]
    %v109 = vld [vmem:[#allocation6 + $0xa8] sm:$0xf]
    %v110 = vld [vmem:[#allocation6 + $0xac] sm:$0xf]
    %v111 = vld [vmem:[#allocation6 + $0xb0] sm:$0xf]
    %v112 = vld [vmem:[#allocation6 + $0xb4] sm:$0xf]
    %v113 = vld [vmem:[#allocation6 + $0xb8] sm:$0xf]
    %v114 = vld [vmem:[#allocation6 + $0xbc] sm:$0xf]
    %v115 = vld [vmem:[#allocation6 + $0xc0] sm:$0xf]
    %v116 = vld [vmem:[#allocation6 + $0xc4] sm:$0xf]
    %v117 = vld [vmem:[#allocation6 + $0xc8] sm:$0xf]
    %v118 = vld [vmem:[#allocation6 + $0xcc] sm:$0xf]
    %v119 = vld [vmem:[#allocation6 + $0xd0] sm:$0xf]
    %v120 = vld [vmem:[#allocation6 + $0xd4] sm:$0xf]
    %v121 = vld [vmem:[#allocation6 + $0xd8] sm:$0xf]
    %v122 = vld [vmem:[#allocation6 + $0xdc] sm:$0xf]
    %v123 = vld [vmem:[#allocation6 + $0xe0] sm:$0xf]
    %v124 = vld [vmem:[#allocation6 + $0xe4] sm:$0xf]
    %v125 = vld [vmem:[#allocation6 + $0xe8] sm:$0xf]
    %v126 = vld [vmem:[#allocation6 + $0xec] sm:$0xf]
    %v127 = vld [vmem:[#allocation6 + $0xf0] sm:$0xf]
    %v128 = vld [vmem:[#allocation6 + $0xf4] sm:$0xf]
    %v129 = vld [vmem:[#allocation6 + $0xf8] sm:$0xf]
    %v130 = vld [vmem:[#allocation6 + $0xfc] sm:$0xf]
    %v131 = vld [vmem:[#allocation6 + $0x100] sm:$0xf]
    %v132 = vld [vmem:[#allocation6 + $0x104] sm:$0xf]
    %v133 = vld [vmem:[#allocation6 + $0x108] sm:$0xf]
    %v134 = vld [vmem:[#allocation6 + $0x10c] sm:$0xf]
    %v135 = vld [vmem:[#allocation6 + $0x110] sm:$0xf]
    %v136 = vld [vmem:[#allocation6 + $0x114] sm:$0xf]
    %v137 = vld [vmem:[#allocation6 + $0x118] sm:$0xf]
    %v138 = vld [vmem:[#allocation6 + $0x11c] sm:$0xf]
    %v139 = vld [vmem:[#allocation6 + $0x120] sm:$0xf]
    %v140 = vld [vmem:[#allocation6 + $0x124] sm:$0xf]
    %v141 = vld [vmem:[#allocation6 + $0x128] sm:$0xf]
    %v142 = vld [vmem:[#allocation6 + $0x12c] sm:$0xf]
    %v143 = vld [vmem:[#allocation6 + $0x130] sm:$0xf]
    %v144 = vld [vmem:[#allocation6 + $0x134] sm:$0xf]
    %v145 = vld [vmem:[#allocation6 + $0x138] sm:$0xf]
    %v146 = vld [vmem:[#allocation6 + $0x13c] sm:$0xf]
    %v147 = vld [vmem:[#allocation6 + $0x140] sm:$0xf]
    %v148 = vld [vmem:[#allocation6 + $0x144] sm:$0xf]
    %v149 = vld [vmem:[#allocation6 + $0x148] sm:$0xf]
    %v150 = vld [vmem:[#allocation6 + $0x14c] sm:$0xf]
    %v151 = vld [vmem:[#allocation6 + $0x150] sm:$0xf]
    %v152 = vld [vmem:[#allocation6 + $0x154] sm:$0xf]
    %v153 = vld [vmem:[#allocation6 + $0x158] sm:$0xf]
    %v154 = vld [vmem:[#allocation6 + $0x15c] sm:$0xf]
    %v155 = vld [vmem:[#allocation6 + $0x160] sm:$0xf]
    %v156 = vld [vmem:[#allocation6 + $0x164] sm:$0xf]
    %v157 = vld [vmem:[#allocation6 + $0x168] sm:$0xf]
    %v158 = vld [vmem:[#allocation6 + $0x16c] sm:$0xf]
    %v159 = vld [vmem:[#allocation6 + $0x170] sm:$0xf]
    %v160 = vld [vmem:[#allocation6 + $0x174] sm:$0xf]
    %v161 = vld [vmem:[#allocation6 + $0x178] sm:$0xf]
    %v162 = vld [vmem:[#allocation6 + $0x17c] sm:$0xf]
    %v163 = vld [vmem:[#allocation6 + $0x180] sm:$0xf]
    %v164 = vld [vmem:[#allocation6 + $0x184] sm:$0xf]
    %v165 = vld [vmem:[#allocation6 + $0x188] sm:$0xf]
    %v166 = vld [vmem:[#allocation6 + $0x18c] sm:$0xf]
    %v167 = vld [vmem:[#allocation6 + $0x190] sm:$0xf]
    %v168 = vld [vmem:[#allocation6 + $0x194] sm:$0xf]
    %v169 = vld [vmem:[#allocation6 + $0x198] sm:$0xf]
    %v170 = vld [vmem:[#allocation6 + $0x19c] sm:$0xf]
    %v171 = vld [vmem:[#allocation6 + $0x1a0] sm:$0xf]
    %v172 = vld [vmem:[#allocation6 + $0x1a4] sm:$0xf]
    %v173 = vld [vmem:[#allocation6 + $0x1a8] sm:$0xf]
    %v174 = vld [vmem:[#allocation6 + $0x1ac] sm:$0xf]
    %v175 = vld [vmem:[#allocation6 + $0x1b0] sm:$0xf]
    %v176 = vld [vmem:[#allocation6 + $0x1b4] sm:$0xf]
    %v177 = vld [vmem:[#allocation6 + $0x1b8] sm:$0xf]
    %v178 = vld [vmem:[#allocation6 + $0x1bc] sm:$0xf]
    %v179 = vld [vmem:[#allocation6 + $0x1c0] sm:$0xf]
    %v180 = vld [vmem:[#allocation6 + $0x1c4] sm:$0xf]
    %v181 = vld [vmem:[#allocation6 + $0x1c8] sm:$0xf]
    %v182 = vld [vmem:[#allocation6 + $0x1cc] sm:$0xf]
    %v183 = vld [vmem:[#allocation6 + $0x1d0] sm:$0xf]
    %v184 = vld [vmem:[#allocation6 + $0x1d4] sm:$0xf]
    %v185 = vld [vmem:[#allocation6 + $0x1d8] sm:$0xf]
    %v186 = vld [vmem:[#allocation6 + $0x1dc] sm:$0xf]
    %v187 = vld [vmem:[#allocation6 + $0x1e0] sm:$0xf]
    %v188 = vld [vmem:[#allocation6 + $0x1e4] sm:$0xf]
    %v189 = vld [vmem:[#allocation6 + $0x1e8] sm:$0xf]
    %v190 = vld [vmem:[#allocation6 + $0x1ec] sm:$0xf]
    %v191 = vld [vmem:[#allocation6 + $0x1f0] sm:$0xf]
    %v192 = vld [vmem:[#allocation6 + $0x1f4] sm:$0xf]
    %v193 = vld [vmem:[#allocation6 + $0x1f8] sm:$0xf]
    %v194 = vld [vmem:[#allocation6 + $0x1fc] sm:$0xf]
    %v195 = vld [vmem:[%s2] sm:$0x1]
    %v197 = vlaneseq
    %v198 = vshrl.u32 %v197, 7
    %v199 = vsub.s32 0, %v198
    %v200 = vrot.slane %v195, %v199
    %v330 = vunpack.c.l.b16 %v67
    %v331 = vunpack.c.l.b16 %v68
    %v332 = vunpack.c.l.b16 %v69
    %v333 = vunpack.c.l.b16 %v70
    %v334 = vunpack.c.l.b16 %v71
    %v335 = vunpack.c.l.b16 %v72
    %v336 = vunpack.c.l.b16 %v73
    %v337 = vunpack.c.l.b16 %v74
    %v338 = vunpack.c.l.b16 %v75
    %v339 = vunpack.c.l.b16 %v76
    %v340 = vunpack.c.l.b16 %v77
    %v341 = vunpack.c.l.b16 %v78
    %v342 = vunpack.c.l.b16 %v79
    %v343 = vunpack.c.l.b16 %v80
    %v344 = vunpack.c.l.b16 %v81
    %v345 = vunpack.c.l.b16 %v82
    %v346 = vunpack.c.l.b16 %v83
    %v347 = vunpack.c.l.b16 %v84
    %v348 = vunpack.c.l.b16 %v85
    %v349 = vunpack.c.l.b16 %v86
    %v350 = vunpack.c.l.b16 %v87
    %v351 = vunpack.c.l.b16 %v88
    %v352 = vunpack.c.l.b16 %v89
    %v353 = vunpack.c.l.b16 %v90
    %v354 = vunpack.c.l.b16 %v91
    %v355 = vunpack.c.l.b16 %v92
    %v356 = vunpack.c.l.b16 %v93
    %v357 = vunpack.c.l.b16 %v94
    %v358 = vunpack.c.l.b16 %v95
    %v359 = vunpack.c.l.b16 %v96
    %v360 = vunpack.c.l.b16 %v97
    %v361 = vunpack.c.l.b16 %v98
    %v362 = vunpack.c.l.b16 %v99
    %v363 = vunpack.c.l.b16 %v100
    %v364 = vunpack.c.l.b16 %v101
    %v365 = vunpack.c.l.b16 %v102
    %v366 = vunpack.c.l.b16 %v103
    %v367 = vunpack.c.l.b16 %v104
    %v368 = vunpack.c.l.b16 %v105
    %v369 = vunpack.c.l.b16 %v106
    %v370 = vunpack.c.l.b16 %v107
    %v371 = vunpack.c.l.b16 %v108
    %v372 = vunpack.c.l.b16 %v109
    %v373 = vunpack.c.l.b16 %v110
    %v374 = vunpack.c.l.b16 %v111
    %v375 = vunpack.c.l.b16 %v112
    %v376 = vunpack.c.l.b16 %v113
    %v377 = vunpack.c.l.b16 %v114
    %v378 = vunpack.c.l.b16 %v115
    %v379 = vunpack.c.l.b16 %v116
    %v380 = vunpack.c.l.b16 %v117
    %v381 = vunpack.c.l.b16 %v118
    %v382 = vunpack.c.l.b16 %v119
    %v383 = vunpack.c.l.b16 %v120
    %v384 = vunpack.c.l.b16 %v121
    %v385 = vunpack.c.l.b16 %v122
    %v386 = vunpack.c.l.b16 %v123
    %v387 = vunpack.c.l.b16 %v124
    %v388 = vunpack.c.l.b16 %v125
    %v389 = vunpack.c.l.b16 %v126
    %v390 = vunpack.c.l.b16 %v127
    %v391 = vunpack.c.l.b16 %v128
    %v392 = vunpack.c.l.b16 %v129
    %v393 = vunpack.c.l.b16 %v130
    %v394 = vunpack.c.l.b16 %v131
    %v395 = vunpack.c.l.b16 %v132
    %v396 = vunpack.c.l.b16 %v133
    %v397 = vunpack.c.l.b16 %v134
    %v398 = vunpack.c.l.b16 %v135
    %v399 = vunpack.c.l.b16 %v136
    %v400 = vunpack.c.l.b16 %v137
    %v401 = vunpack.c.l.b16 %v138
    %v402 = vunpack.c.l.b16 %v139
    %v403 = vunpack.c.l.b16 %v140
    %v404 = vunpack.c.l.b16 %v141
    %v405 = vunpack.c.l.b16 %v142
    %v406 = vunpack.c.l.b16 %v143
    %v407 = vunpack.c.l.b16 %v144
    %v408 = vunpack.c.l.b16 %v145
    %v409 = vunpack.c.l.b16 %v146
    %v410 = vunpack.c.l.b16 %v147
    %v411 = vunpack.c.l.b16 %v148
    %v412 = vunpack.c.l.b16 %v149
    %v413 = vunpack.c.l.b16 %v150
    %v414 = vunpack.c.l.b16 %v151
    %v415 = vunpack.c.l.b16 %v152
    %v416 = vunpack.c.l.b16 %v153
    %v417 = vunpack.c.l.b16 %v154
    %v418 = vunpack.c.l.b16 %v155
    %v419 = vunpack.c.l.b16 %v156
    %v420 = vunpack.c.l.b16 %v157
    %v421 = vunpack.c.l.b16 %v158
    %v422 = vunpack.c.l.b16 %v159
    %v423 = vunpack.c.l.b16 %v160
    %v424 = vunpack.c.l.b16 %v161
    %v425 = vunpack.c.l.b16 %v162
    %v426 = vunpack.c.l.b16 %v163
    %v427 = vunpack.c.l.b16 %v164
    %v428 = vunpack.c.l.b16 %v165
    %v429 = vunpack.c.l.b16 %v166
    %v430 = vunpack.c.l.b16 %v167
    %v431 = vunpack.c.l.b16 %v168
    %v432 = vunpack.c.l.b16 %v169
    %v433 = vunpack.c.l.b16 %v170
    %v434 = vunpack.c.l.b16 %v171
    %v435 = vunpack.c.l.b16 %v172
    %v436 = vunpack.c.l.b16 %v173
    %v437 = vunpack.c.l.b16 %v174
    %v438 = vunpack.c.l.b16 %v175
    %v439 = vunpack.c.l.b16 %v176
    %v440 = vunpack.c.l.b16 %v177
    %v441 = vunpack.c.l.b16 %v178
    %v442 = vunpack.c.l.b16 %v179
    %v443 = vunpack.c.l.b16 %v180
    %v444 = vunpack.c.l.b16 %v181
    %v445 = vunpack.c.l.b16 %v182
    %v446 = vunpack.c.l.b16 %v183
    %v447 = vunpack.c.l.b16 %v184
    %v448 = vunpack.c.l.b16 %v185
    %v449 = vunpack.c.l.b16 %v186
    %v450 = vunpack.c.l.b16 %v187
    %v451 = vunpack.c.l.b16 %v188
    %v452 = vunpack.c.l.b16 %v189
    %v453 = vunpack.c.l.b16 %v190
    %v454 = vunpack.c.l.b16 %v191
    %v455 = vunpack.c.l.b16 %v192
    %v456 = vunpack.c.l.b16 %v193
    %v457 = vunpack.c.l.b16 %v194
    %v458 = vpack.c.b16 %v331, %v330
    %v459 = vpack.c.b16 %v333, %v332
    %v460 = vpack.c.b16 %v335, %v334
    %v461 = vpack.c.b16 %v337, %v336
    %v462 = vpack.c.b16 %v339, %v338
    %v463 = vpack.c.b16 %v341, %v340
    %v464 = vpack.c.b16 %v343, %v342
    %v465 = vpack.c.b16 %v345, %v344
    %v466 = vpack.c.b16 %v347, %v346
    %v467 = vpack.c.b16 %v349, %v348
    %v468 = vpack.c.b16 %v351, %v350
    %v469 = vpack.c.b16 %v353, %v352
    %v470 = vpack.c.b16 %v355, %v354
    %v471 = vpack.c.b16 %v357, %v356
    %v472 = vpack.c.b16 %v359, %v358
    %v473 = vpack.c.b16 %v361, %v360
    %v474 = vpack.c.b16 %v363, %v362
    %v475 = vpack.c.b16 %v365, %v364
    %v476 = vpack.c.b16 %v367, %v366
    %v477 = vpack.c.b16 %v369, %v368
    %v478 = vpack.c.b16 %v371, %v370
    %v479 = vpack.c.b16 %v373, %v372
    %v480 = vpack.c.b16 %v375, %v374
    %v481 = vpack.c.b16 %v377, %v376
    %v482 = vpack.c.b16 %v379, %v378
    %v483 = vpack.c.b16 %v381, %v380
    %v484 = vpack.c.b16 %v383, %v382
    %v485 = vpack.c.b16 %v385, %v384
    %v486 = vpack.c.b16 %v387, %v386
    %v487 = vpack.c.b16 %v389, %v388
    %v488 = vpack.c.b16 %v391, %v390
    %v489 = vpack.c.b16 %v393, %v392
    %v490 = vpack.c.b16 %v395, %v394
    %v491 = vpack.c.b16 %v397, %v396
    %v492 = vpack.c.b16 %v399, %v398
    %v493 = vpack.c.b16 %v401, %v400
    %v494 = vpack.c.b16 %v403, %v402
    %v495 = vpack.c.b16 %v405, %v404
    %v496 = vpack.c.b16 %v407, %v406
    %v497 = vpack.c.b16 %v409, %v408
    %v498 = vpack.c.b16 %v411, %v410
    %v499 = vpack.c.b16 %v413, %v412
    %v500 = vpack.c.b16 %v415, %v414
    %v501 = vpack.c.b16 %v417, %v416
    %v502 = vpack.c.b16 %v419, %v418
    %v503 = vpack.c.b16 %v421, %v420
    %v504 = vpack.c.b16 %v423, %v422
    %v505 = vpack.c.b16 %v425, %v424
    %v506 = vpack.c.b16 %v427, %v426
    %v507 = vpack.c.b16 %v429, %v428
    %v508 = vpack.c.b16 %v431, %v430
    %v509 = vpack.c.b16 %v433, %v432
    %v510 = vpack.c.b16 %v435, %v434
    %v511 = vpack.c.b16 %v437, %v436
    %v512 = vpack.c.b16 %v439, %v438
    %v513 = vpack.c.b16 %v441, %v440
    %v514 = vpack.c.b16 %v443, %v442
    %v515 = vpack.c.b16 %v445, %v444
    %v516 = vpack.c.b16 %v447, %v446
    %v517 = vpack.c.b16 %v449, %v448
    %v518 = vpack.c.b16 %v451, %v450
    %v519 = vpack.c.b16 %v453, %v452
    %v520 = vpack.c.b16 %v455, %v454
    %v521 = vpack.c.b16 %v457, %v456
    %586 = vmatprep.subr.bf16.mxu0 0
    %587 = vmatpush1.bf16.msra.mxu0 %v458
    %588 = vmatprep.subr.bf16.mxu0 0
    %589 = vmatpush1.bf16.msra.mxu0 %v459
    %590 = vmatprep.subr.bf16.mxu0 0
    %591 = vmatpush1.bf16.msra.mxu0 %v460
    %592 = vmatprep.subr.bf16.mxu0 0
    %593 = vmatpush1.bf16.msra.mxu0 %v461
    %594 = vmatprep.subr.bf16.mxu0 0
    %595 = vmatpush1.bf16.msra.mxu0 %v462
    %596 = vmatprep.subr.bf16.mxu0 0
    %597 = vmatpush1.bf16.msra.mxu0 %v463
    %598 = vmatprep.subr.bf16.mxu0 0
    %599 = vmatpush1.bf16.msra.mxu0 %v464
    %600 = vmatprep.subr.bf16.mxu0 0
    %601 = vmatpush1.bf16.msra.mxu0 %v465
    %602 = vmatprep.subr.bf16.mxu0 0
    %603 = vmatpush1.bf16.msra.mxu0 %v466
    %604 = vmatprep.subr.bf16.mxu0 0
    %605 = vmatpush1.bf16.msra.mxu0 %v467
    %606 = vmatprep.subr.bf16.mxu0 0
    %607 = vmatpush1.bf16.msra.mxu0 %v468
    %608 = vmatprep.subr.bf16.mxu0 0
    %609 = vmatpush1.bf16.msra.mxu0 %v469
    %610 = vmatprep.subr.bf16.mxu0 0
    %611 = vmatpush1.bf16.msra.mxu0 %v470
    %612 = vmatprep.subr.bf16.mxu0 0
    %613 = vmatpush1.bf16.msra.mxu0 %v471
    %614 = vmatprep.subr.bf16.mxu0 0
    %615 = vmatpush1.bf16.msra.mxu0 %v472
    %616 = vmatprep.subr.bf16.mxu0 0
    %617 = vmatpush1.bf16.msra.mxu0 %v473
    %618 = vmatprep.mubr.bf16.mxu0 %v60
    %619 = vmatmul.mubr.bf16.gmra.mrb[0].mxu0 %v59
    %v620 = vpop.f32.mrb[0].mxu0
    %v621 = vadd.f32 %v200, %v620
    %v622 = vpop.f32.mrb[0].mxu0
    %v623 = vpop.f32.mrb[0].mxu0
    %v624 = vpop.f32.mrb[0].mxu0
    %625 = vdwg.mxu0
    %626 = vmatprep.subr.bf16.mxu0 0
    %627 = vmatpush1.bf16.msra.mxu0 %v474
    %628 = vmatprep.subr.bf16.mxu0 0
    %629 = vmatpush1.bf16.msra.mxu0 %v475
    %630 = vmatprep.subr.bf16.mxu0 0
    %631 = vmatpush1.bf16.msra.mxu0 %v476
    %632 = vmatprep.subr.bf16.mxu0 0
    %633 = vmatpush1.bf16.msra.mxu0 %v477
    %634 = vmatprep.subr.bf16.mxu0 0
    %635 = vmatpush1.bf16.msra.mxu0 %v478
    %636 = vmatprep.subr.bf16.mxu0 0
    %637 = vmatpush1.bf16.msra.mxu0 %v479
    %638 = vmatprep.subr.bf16.mxu0 0
    %639 = vmatpush1.bf16.msra.mxu0 %v480
    %640 = vmatprep.subr.bf16.mxu0 0
    %641 = vmatpush1.bf16.msra.mxu0 %v481
    %642 = vmatprep.subr.bf16.mxu0 0
    %643 = vmatpush1.bf16.msra.mxu0 %v482
    %644 = vmatprep.subr.bf16.mxu0 0
    %645 = vmatpush1.bf16.msra.mxu0 %v483
    %646 = vmatprep.subr.bf16.mxu0 0
    %647 = vmatpush1.bf16.msra.mxu0 %v484
    %648 = vmatprep.subr.bf16.mxu0 0
    %649 = vmatpush1.bf16.msra.mxu0 %v485
    %650 = vmatprep.subr.bf16.mxu0 0
    %651 = vmatpush1.bf16.msra.mxu0 %v486
    %652 = vmatprep.subr.bf16.mxu0 0
    %653 = vmatpush1.bf16.msra.mxu0 %v487
    %654 = vmatprep.subr.bf16.mxu0 0
    %655 = vmatpush1.bf16.msra.mxu0 %v488
    %656 = vmatprep.subr.bf16.mxu0 0
    %657 = vmatpush1.bf16.msra.mxu0 %v489
    %658 = vmatprep.mubr.bf16.mxu0 %v62
    %659 = vmatmul.mubr.bf16.gmra.mrb[0].mxu0 %v61
    %v660 = vpop.f32.mrb[0].mxu0
    %v661 = vadd.f32 %v621, %v660
    %v662 = vpop.f32.mrb[0].mxu0
    %v663 = vpop.f32.mrb[0].mxu0
    %v664 = vpop.f32.mrb[0].mxu0
    %665 = vdwg.mxu0
    %666 = vmatprep.subr.bf16.mxu0 0
    %667 = vmatpush1.bf16.msra.mxu0 %v490
    %668 = vmatprep.subr.bf16.mxu0 0
    %669 = vmatpush1.bf16.msra.mxu0 %v491
    %670 = vmatprep.subr.bf16.mxu0 0
    %671 = vmatpush1.bf16.msra.mxu0 %v492
    %672 = vmatprep.subr.bf16.mxu0 0
    %673 = vmatpush1.bf16.msra.mxu0 %v493
    %674 = vmatprep.subr.bf16.mxu0 0
    %675 = vmatpush1.bf16.msra.mxu0 %v494
    %676 = vmatprep.subr.bf16.mxu0 0
    %677 = vmatpush1.bf16.msra.mxu0 %v495
    %678 = vmatprep.subr.bf16.mxu0 0
    %679 = vmatpush1.bf16.msra.mxu0 %v496
    %680 = vmatprep.subr.bf16.mxu0 0
    %681 = vmatpush1.bf16.msra.mxu0 %v497
    %682 = vmatprep.subr.bf16.mxu0 0
    %683 = vmatpush1.bf16.msra.mxu0 %v498
    %684 = vmatprep.subr.bf16.mxu0 0
    %685 = vmatpush1.bf16.msra.mxu0 %v499
    %686 = vmatprep.subr.bf16.mxu0 0
    %687 = vmatpush1.bf16.msra.mxu0 %v500
    %688 = vmatprep.subr.bf16.mxu0 0
    %689 = vmatpush1.bf16.msra.mxu0 %v501
    %690 = vmatprep.subr.bf16.mxu0 0
    %691 = vmatpush1.bf16.msra.mxu0 %v502
    %692 = vmatprep.subr.bf16.mxu0 0
    %693 = vmatpush1.bf16.msra.mxu0 %v503
    %694 = vmatprep.subr.bf16.mxu0 0
    %695 = vmatpush1.bf16.msra.mxu0 %v504
    %696 = vmatprep.subr.bf16.mxu0 0
    %697 = vmatpush1.bf16.msra.mxu0 %v505
    %698 = vmatprep.mubr.bf16.mxu0 %v64
    %699 = vmatmul.mubr.bf16.gmra.mrb[0].mxu0 %v63
    %v700 = vpop.f32.mrb[0].mxu0
    %v701 = vadd.f32 %v661, %v700
    %v702 = vpop.f32.mrb[0].mxu0
    %v703 = vpop.f32.mrb[0].mxu0
    %v704 = vpop.f32.mrb[0].mxu0
    %705 = vdwg.mxu0
    %706 = vmatprep.subr.bf16.mxu0 0
    %707 = vmatpush1.bf16.msra.mxu0 %v506
    %708 = vmatprep.subr.bf16.mxu0 0
    %709 = vmatpush1.bf16.msra.mxu0 %v507
    %710 = vmatprep.subr.bf16.mxu0 0
    %711 = vmatpush1.bf16.msra.mxu0 %v508
    %712 = vmatprep.subr.bf16.mxu0 0
    %713 = vmatpush1.bf16.msra.mxu0 %v509
    %714 = vmatprep.subr.bf16.mxu0 0
    %715 = vmatpush1.bf16.msra.mxu0 %v510
    %716 = vmatprep.subr.bf16.mxu0 0
    %717 = vmatpush1.bf16.msra.mxu0 %v511
    %718 = vmatprep.subr.bf16.mxu0 0
    %719 = vmatpush1.bf16.msra.mxu0 %v512
    %720 = vmatprep.subr.bf16.mxu0 0
    %721 = vmatpush1.bf16.msra.mxu0 %v513
    %722 = vmatprep.subr.bf16.mxu0 0
    %723 = vmatpush1.bf16.msra.mxu0 %v514
    %724 = vmatprep.subr.bf16.mxu0 0
    %725 = vmatpush1.bf16.msra.mxu0 %v515
    %726 = vmatprep.subr.bf16.mxu0 0
    %727 = vmatpush1.bf16.msra.mxu0 %v516
    %728 = vmatprep.subr.bf16.mxu0 0
    %729 = vmatpush1.bf16.msra.mxu0 %v517
    %730 = vmatprep.subr.bf16.mxu0 0
    %731 = vmatpush1.bf16.msra.mxu0 %v518
    %732 = vmatprep.subr.bf16.mxu0 0
    %733 = vmatpush1.bf16.msra.mxu0 %v519
    %734 = vmatprep.subr.bf16.mxu0 0
    %735 = vmatpush1.bf16.msra.mxu0 %v520
    %736 = vmatprep.subr.bf16.mxu0 0
    %737 = vmatpush1.bf16.msra.mxu0 %v521
    %738 = vmatprep.mubr.bf16.mxu0 %v66
    %739 = vmatmul.mubr.bf16.gmra.mrb[0].mxu0 %v65
    %v740 = vpop.f32.mrb[0].mxu0
    %v741 = vadd.f32 %v701, %v740
    %v742 = vpop.f32.mrb[0].mxu0
    %v743 = vpop.f32.mrb[0].mxu0
    %v744 = vpop.f32.mrb[0].mxu0
    %745 = vdwg.mxu0
    %746 = vst [vmem:[#allocation8] sm:$0xff] %v741
    %v747 = vld [vmem:[%s3] sm:$0xff]
    %v748 = vmul.f32 %v747, 0.25
    %vm749 = vcmask 261120
    %v750 = vsel %vm749, %v748, -inf
    %751 = vmax.xlane.f32.xlu0 %v750
    %v752 = vpop.xlane.xlu0 %751
    %v753 = vsub.f32 %v748, %v752
    %v754 = vmul.f32 %v753, 1.442695
    %v755 = vpow.pop %v754
    %v756 = vsel %vm749, %v755, 0.0
    %757 = vadd.xlane.f32.xlu0 %v756
    %v758 = vpop.xlane.xlu0 %757
    %v759 = vrcp.pop %v758
    %v760 = vmul.f32 %v755, %v759
    %v761 = vsub.f32 %v741, %v760
    %v762 = vld [vmem:[%s4] sm:$0xff]
    %764 = vset.pattern.permute.xlu0 0
    %765 = vperm.xlu0 %764, %v762
    %v766 = vpop.permute.xlu0 %765
    %v768 = vmul.f32 %v761, %v766
    %v769 = vmul.f32 %v768, %v768
    %v770 = vsel %vm749, %v769, 0.0
    %771 = vadd.xlane.f32.xlu0 %v770
    %v772 = vpop.xlane.xlu0 %771
    %v773 = vrot.slane %v772, 4
    %v774 = vadd.f32 %v772, %v773
    %v775 = vrot.slane %v774, 2
    %v776 = vadd.f32 %v774, %v775
    %v777 = vrot.slane %v776, 1
    %v778 = vadd.f32 %v776, %v777
    %s779 = vtos %v778
    %s780 = scalar_lea.smem [#allocation9], 0
    %781 = sst [smem:[%s780]] %s779
    // Predicated region
    $region30: #{tpu_custom_call.1} parent=1 // pred_check
      _
    $region31: #{tpu_custom_call.1} parent=1 // pred_check_branch
      %783 = sbr.rel (0) target = $region33
    $region32: #{tpu_custom_call.1} parent=1 // pred_region
      %s785 = ssub.s32 128, 128
      %786 = vsyncadd [#allocation4], %s785
      %s788 = sshll.u32 [#allocation8], 4
      %s789 = int_to_ptr.vmem [resolvable:$true] %s788
      %791 = dma.vmem_to_hbm [thread:$0]  %s789, 128, %s5, [#allocation4]
    $region33: #{tpu_custom_call.1} parent=1 // pred_fallthru
      _
    // Predicated region
    $region34: #{tpu_custom_call.1} parent=1 // pred_check
      _
    $region35: #{tpu_custom_call.1} parent=1 // pred_check_branch
      %793 = sbr.rel (0) target = $region37
    $region36: #{tpu_custom_call.1} parent=1 // pred_region
      %s795 = ssub.s32 16, 16
      %796 = vsyncadd [#allocation5], %s795
      %799 = dma.smem_to_hbm [#allocation9], 16, %s6, [#allocation5]
    $region37: #{tpu_custom_call.1} parent=1 // pred_fallthru
      _
    // Predicated region
    $region38: #{tpu_custom_call.1} parent=1 // pred_check
      _
    $region39: #{tpu_custom_call.1} parent=1 // pred_check_branch
      %801 = sbr.rel (0) target = $region41
    $region40: #{tpu_custom_call.1} parent=1 // pred_region
      %802 = dma.done [#allocation4], 128
    $region41: #{tpu_custom_call.1} parent=1 // pred_fallthru
      _
    // Predicated region
    $region42: #{tpu_custom_call.1} parent=1 // pred_check
      _
    $region43: #{tpu_custom_call.1} parent=1 // pred_check_branch
      %804 = sbr.rel (0) target = $region45
    $region44: #{tpu_custom_call.1} parent=1 // pred_region
      %805 = dma.done [#allocation5], 16
    $region45: #{tpu_custom_call.1} parent=1 // pred_fallthru
      _
    %806 = sfence
    %807 = vsyncpa [#allocation3], 1
    %808 = vsyncpa [#allocation7], 1
    %809 = vsyncpa [#allocation4], 1
    %810 = vsyncpa [#allocation5], 1

</llo_original>
